<compile_context>
chip_gen: v7x
topology: tpu7x:2x2x1
jax: 0.10.0
libtpu: 0.0.40
codegen_flags: <defaults>
</compile_context>

<pallas_src>
import functools
import math

import jax
import jax.numpy as jnp
from jax.experimental import pallas as pl
from jax.experimental.pallas import tpu as pltpu


_LANES = 128
_MAX_TILE_ROWS = 2048  # 2048 * 128 * 4 B = 1 MiB per f32 tile


# ---------------------------------------------------------------------------
# Buffer setup (glue, plain JAX) — deterministic, mirrors __init__
# ---------------------------------------------------------------------------
def make_positional_encoding(d_model: int, max_len: int = 5000,
                             dtype=jnp.float32) -> jnp.ndarray:
    position = jnp.arange(0, max_len, dtype=jnp.float32)[:, None]      # (max_len, 1)
    div_term = jnp.exp(
        jnp.arange(0, d_model, dtype=jnp.float32) * (-math.log(10000.0) / d_model)
    )                                                                  # (d_model,)
    ang = position * div_term                                          # (max_len, d_model)
    pe = jnp.sin(ang) + jnp.cos(ang)                                   # pe += sin; pe += cos
    return pe[:, None, :].astype(dtype)                                # (max_len, 1, d_model)


def _round_up(a: int, m: int) -> int:
    return (a + m - 1) // m * m


# ---------------------------------------------------------------------------
# Kernels
# ---------------------------------------------------------------------------
def _pe_add_kernel(x_ref, pe_ref, o_ref):
    # Lane-dense (tile_rows, 128) tiles; plain VPU add, 2 vld : 1 vst.
    o_ref[...] = x_ref[...] + pe_ref[...]


def _pe_dropout_kernel(x_ref, pe_ref, bits_ref, o_ref, *, threshold, scale):
    # bits are uniform uint32; P(bits >= threshold) = 1 - p  => keep prob.
    # TODO(synk): random stream differs from torch.nn.Dropout's RNG (not bit-exact).
    y = x_ref[...] + pe_ref[...]
    keep = bits_ref[...] >= jnp.asarray(threshold, jnp.uint32)
    o_ref[...] = jnp.where(keep, y * jnp.asarray(scale, y.dtype),
                           jnp.zeros_like(y))


# ---------------------------------------------------------------------------
# Wrapper
# ---------------------------------------------------------------------------
def positional_encoding_forward(x, pe, pos=0, *, dropout_p=0.1,
                                training=False, rng_key=None):
    """x: (S, B, D), pe: (max_len, 1, D). Returns (S, B, D)."""
    S, B, D = x.shape
    # TODO(synk): pos could be fed via scalar prefetch + index_map offset, but
    # the lane-dense flattening below needs the batch-broadcast pe window
    # anyway, so the window is built here (small: S*D elements).
    pe_win = jax.lax.dynamic_slice(pe, (pos, 0, 0), (S, 1, D))
    pe_b = jnp.broadcast_to(pe_win, (S, B, D)).astype(x.dtype)

    # Flatten operands to a lane-dense (rows, 128) slab.
    n = S * B * D
    rows = pl.cdiv(n, _LANES)
    if rows <= _MAX_TILE_ROWS:
        tile_rows, rows_padded = rows, rows          # single full-extent block
    else:
        tile_rows = _MAX_TILE_ROWS                   # multiple of 8 sublanes
        rows_padded = _round_up(rows, tile_rows)
    n_pad = rows_padded * _LANES

    def to_slab(a):
        flat = a.reshape(-1)
        if n_pad != n:
            flat = jnp.pad(flat, (0, n_pad - n))
        return flat.reshape(rows_padded, _LANES)

    x2, pe2 = to_slab(x), to_slab(pe_b)
    grid = (rows_padded // tile_rows,)
    spec = pl.BlockSpec((tile_rows, _LANES), lambda i: (i, 0))
    itemsize = jnp.dtype(x.dtype).itemsize
    cparams = pltpu.CompilerParams(dimension_semantics=("parallel",))

    if (not training) or dropout_p == 0.0:
        cost = pl.CostEstimate(flops=n_pad, transcendentals=0,
                               bytes_accessed=3 * n_pad * itemsize)
        out2 = pl.pallas_call(
            _pe_add_kernel,
            out_shape=jax.ShapeDtypeStruct((rows_padded, _LANES), x.dtype),
            grid_spec=pltpu.PrefetchScalarGridSpec(
                num_scalar_prefetch=0,
                grid=grid,
                in_specs=[spec, spec],
                out_specs=spec,
            ),
            compiler_params=cparams,
            input_output_aliases={0: 0},   # reuse the x slab's HBM buffer
            cost_estimate=cost,
        )(x2, pe2)
    else:
        p = float(dropout_p)
        threshold = min(int(round(p * float(1 << 32))), (1 << 32) - 1)
        kernel = functools.partial(_pe_dropout_kernel,
                                   threshold=threshold,
                                   scale=1.0 / (1.0 - p))
        if rng_key is None:
            rng_key = jax.random.PRNGKey(0)
        bits2 = jax.random.bits(rng_key, (rows_padded, _LANES), dtype=jnp.uint32)
        cost = pl.CostEstimate(flops=3 * n_pad, transcendentals=0,
                               bytes_accessed=(2 * itemsize + 4 + itemsize) * n_pad)
        out2 = pl.pallas_call(
            kernel,
            out_shape=jax.ShapeDtypeStruct((rows_padded, _LANES), x.dtype),
            grid_spec=pltpu.PrefetchScalarGridSpec(
                num_scalar_prefetch=0,
                grid=grid,
                in_specs=[spec, spec, spec],
                out_specs=spec,
            ),
            compiler_params=cparams,
            input_output_aliases={0: 0},   # reuse the x slab's HBM buffer
            cost_estimate=cost,
        )(x2, pe2, bits2)

    return out2.reshape(-1)[:n].reshape(S, B, D)


# ---------------------------------------------------------------------------
# Demo / self-check
# ---------------------------------------------------------------------------
if __name__ == "__main__":
    d_model, seq_len, batch, max_len, pos = 32, 8, 2, 5000, 0

    key = jax.random.PRNGKey(0)
    kx, kdrop = jax.random.split(key)
    x = jax.random.normal(kx, (seq_len, batch, d_model), dtype=jnp.float32)
    pe = make_positional_encoding(d_model, max_len=max_len)

    # Eval-mode forward (dropout == identity) — matches torch eval exactly.
    out = positional_encoding_forward(x, pe, pos=pos, dropout_p=0.1,
                                      training=False)
    out = jax.block_until_ready(out)
    ref = x + pe[pos:pos + seq_len, :]
    assert out.shape == (seq_len, batch, d_model)
    assert jnp.allclose(out, ref, atol=1e-6, rtol=1e-6), "eval mismatch"

    # Training-mode forward: every element is either 0 (dropped) or ref/(1-p).
    p = 0.1
    out_tr = positional_encoding_forward(x, pe, pos=pos, dropout_p=p,
                                         training=True, rng_key=kdrop)
    out_tr = jax.block_until_ready(out_tr)
    scale = 1.0 / (1.0 - p)
    ok = jnp.isclose(out_tr, 0.0, atol=1e-6) | jnp.isclose(
        out_tr, ref * scale, rtol=1e-5, atol=1e-6)
    assert bool(jnp.all(ok)), "dropout mismatch"

    print("KERNEL_OK")
</pallas_src>

<mosaic_0001>
module attributes {stable_mosaic.version = 11 : i64} {
  func.func @_pe_add_kernel(%arg0: i32, %arg1: memref<4x128xf32, #tpu.memory_space<vmem>>, %arg2: memref<4x128xf32, #tpu.memory_space<vmem>>, %arg3: memref<4x128xf32, #tpu.memory_space<vmem>>) attributes {dimension_semantics = [#tpu.dimension_semantics<parallel>], iteration_bounds = array<i64: 1>, scalar_prefetch = 0 : i64, scratch_operands = 0 : i64, tpu.core_type = #tpu.core_type<tc>, window_params = [{transform_indices = @transform_0, window_bounds = array<i64: 4, 128>}, {transform_indices = @transform_1, window_bounds = array<i64: 4, 128>}, {transform_indices = @transform_2, window_bounds = array<i64: 4, 128>}]} {
    %c0 = arith.constant 0 : index
    %c0_0 = arith.constant 0 : index
    %0 = vector.load %arg1[%c0, %c0_0] : memref<4x128xf32, #tpu.memory_space<vmem>>, vector<4x128xf32>
    %c0_1 = arith.constant 0 : index
    %c0_2 = arith.constant 0 : index
    %1 = vector.load %arg2[%c0_1, %c0_2] : memref<4x128xf32, #tpu.memory_space<vmem>>, vector<4x128xf32>
    %2 = arith.addf %0, %1 : vector<4x128xf32>
    %c0_3 = arith.constant 0 : index
    %c0_4 = arith.constant 0 : index
    %3 = vector.load %arg3[%c0_3, %c0_4] : memref<4x128xf32, #tpu.memory_space<vmem>>, vector<4x128xf32>
    tpu.vector_store %arg3[%c0_3, %c0_4], %2 {strides = array<i32>} : memref<4x128xf32, #tpu.memory_space<vmem>>, vector<4x128xf32>,
    return
  }
  func.func @transform_0(%arg0: i32) -> (i32, i32) {
    %c0_i32 = arith.constant 0 : i32
    %c0_i32_0 = arith.constant 0 : i32
    return %arg0, %c0_i32 : i32, i32
  }
  func.func @transform_1(%arg0: i32) -> (i32, i32) {
    %c0_i32 = arith.constant 0 : i32
    %c0_i32_0 = arith.constant 0 : i32
    return %arg0, %c0_i32 : i32, i32
  }
  func.func @transform_2(%arg0: i32) -> (i32, i32) {
    %c0_i32 = arith.constant 0 : i32
    %c0_i32_0 = arith.constant 0 : i32
    return %arg0, %c0_i32 : i32, i32
  }
}

</mosaic_0001>

<llo_original>
// kernel: tpu_custom_call.1
$region0: #{tpu_custom_call.1}
  #allocation0 [shape = 'u32[]', space=smem, size = 0x4, offset = 0x4, fixed_abs, tag = 'smem constant byte address 0x4 - core index']
  #allocation1 [shape = 'u32[144,128]{1,0:T(1,128)}', space=vmem, size = 0x12000, scoped, tag = 'internal scratch']
  %s0 = inlined_call_operand.hbm [shape: f32[4,128], index: 0, kind: input, shape index: {}, may-alias: {0,2}]
  %s1 = inlined_call_operand.vmem [shape: f32[4,128], index: 1, kind: input, shape index: {}]
  %s2 = inlined_call_operand.hbm [shape: f32[4,128], index: 2, kind: output, shape index: {}, may-alias: {0,2}]
  %s3 = sld [smem:[#allocation0]]
  $region22: #{tpu_custom_call.1} parent=0
    _
  %s5 = ssub.s32 1, %s3
  %s6 = scalar_select 0, %s5, %s3
  $region1: #{tpu_custom_call.1} parent=0
    #allocation2 [shape = 'u8[2048]{0}', space=vmem, size = 0x800, scoped, tag = 'input window, operand 0, single buffered']
    #allocation3 [shape = 's32[1]{0}', space=sflag, size = 0x4, scoped, tag = 'scoped memory for tpu_custom_call.1']
    #allocation4 [shape = 's32[1]{0}', space=sflag, size = 0x4, scoped, tag = 'scoped memory for tpu_custom_call.1']
    #allocation5 [shape = 'u8[2048]{0}', space=vmem, size = 0x800, scoped, tag = 'output window, operand 0, single buffered']
    %7 = vsyncpa [#allocation3], 0
    %8 = vsyncpa [#allocation4], 0
    // Predicated region
    $region2: #{tpu_custom_call.1} parent=1 // pred_check
      _
    $region3: #{tpu_custom_call.1} parent=1 // pred_check_branch
      %10 = sbr.rel (0) target = $region5
    $region4: #{tpu_custom_call.1} parent=1 // pred_region
      %s12 = ssub.s32 64, 64
      %13 = vsyncadd [#allocation3], %s12
      %s15 = sshll.u32 [#allocation2], 4
      %s16 = int_to_ptr.vmem [resolvable:$true] %s15
      %18 = dma.hbm_to_vmem [thread:$0]  %s0, 64, %s16, [#allocation3]
    $region5: #{tpu_custom_call.1} parent=1 // pred_fallthru
      _
    // Predicated region
    $region6: #{tpu_custom_call.1} parent=1 // pred_check
      _
    $region7: #{tpu_custom_call.1} parent=1 // pred_check_branch
      %20 = sbr.rel (0) target = $region9
    $region8: #{tpu_custom_call.1} parent=1 // pred_region
      _
    $region9: #{tpu_custom_call.1} parent=1 // pred_fallthru
      _
    // Predicated region
    $region10: #{tpu_custom_call.1} parent=1 // pred_check
      _
    $region11: #{tpu_custom_call.1} parent=1 // pred_check_branch
      %22 = sbr.rel (0) target = $region13
    $region12: #{tpu_custom_call.1} parent=1 // pred_region
      %23 = dma.done [#allocation3], 64
    $region13: #{tpu_custom_call.1} parent=1 // pred_fallthru
      _
    %v24 = vld [vmem:[#allocation2] sm:$0xf]
    %v25 = vld [vmem:[%s1] sm:$0xf]
    %v26 = vadd.f32 %v24, %v25
    %27 = vst [vmem:[#allocation5] sm:$0xf] %v26
    // Predicated region
    $region14: #{tpu_custom_call.1} parent=1 // pred_check
      _
    $region15: #{tpu_custom_call.1} parent=1 // pred_check_branch
      %29 = sbr.rel (0) target = $region17
    $region16: #{tpu_custom_call.1} parent=1 // pred_region
      %s31 = ssub.s32 64, 64
      %32 = vsyncadd [#allocation4], %s31
      %s34 = sshll.u32 [#allocation5], 4
      %s35 = int_to_ptr.vmem [resolvable:$true] %s34
      %37 = dma.vmem_to_hbm [thread:$0]  %s35, 64, %s2, [#allocation4]
    $region17: #{tpu_custom_call.1} parent=1 // pred_fallthru
      _
    // Predicated region
    $region18: #{tpu_custom_call.1} parent=1 // pred_check
      _
    $region19: #{tpu_custom_call.1} parent=1 // pred_check_branch
      %39 = sbr.rel (0) target = $region21
    $region20: #{tpu_custom_call.1} parent=1 // pred_region
      %40 = dma.done [#allocation4], 64
    $region21: #{tpu_custom_call.1} parent=1 // pred_fallthru
      _
    %41 = vsyncpa [#allocation3], 1
    %42 = vsyncpa [#allocation4], 1

</llo_original>
